<compile_context>
chip_gen: v5e
topology: v5e:2x2
jax: 0.10.0
libtpu: 0.0.40
codegen_flags: <defaults>
</compile_context>

<pallas_src>
import functools

import jax
import jax.numpy as jnp
from jax.experimental import pallas as pl
from jax.experimental.pallas import tpu as pltpu

FLAG_LEN = 26   # in_features
H1 = 22
H2 = 18

TB_DEFAULT = 8192  # batch rows per grid step (see VMEM budget note above)


def mlp_kernel(x_ref, w1_ref, b1_ref, w2_ref, b2_ref, o_ref):
    # h = relu(x @ w1 + b1) ; o = h @ w2 + b2
    x = x_ref[...]
    h = jnp.dot(x, w1_ref[...], preferred_element_type=jnp.float32)
    h = jnp.maximum(h + b1_ref[...], 0.0)      # b1 is (1, H1): sublane broadcast
    o = jnp.dot(h, w2_ref[...], preferred_element_type=jnp.float32)
    o_ref[...] = o + b2_ref[...]               # b2 is (1, H2)


@functools.partial(jax.jit, static_argnames=("block_rows",))
def mlp_forward(x, w1, b1, w2, b2, *, block_rows=TB_DEFAULT):
    # NOTE: at genuinely tiny batch (a few hundred rows) plain XLA fusion of
    # relu(x@w1+b1)@w2+b2 is faster than any pallas_call; this kernel targets
    # the large-batch regime but remains correct for any batch size.
    batch = x.shape[0]

    # Batch tile: multiple of 8 (sublane), capped by block_rows and by the
    # (rounded-up) batch itself.
    tb = min(block_rows, ((batch + 7) // 8) * 8)
    tb = max(8, (tb // 8) * 8)

    num_tiles = pl.cdiv(batch, tb)
    padded_batch = num_tiles * tb
    if padded_batch != batch:
        # Pad so every grid step sees a full (tb, FLAG_LEN) block; padded rows
        # are computed and then sliced away (rows are independent).
        x = jnp.pad(x, ((0, padded_batch - batch), (0, 0)))

    flops = 2 * padded_batch * (FLAG_LEN * H1 + H1 * H2) + padded_batch * (2 * H1 + H2)
    bytes_accessed = 4 * (
        padded_batch * (FLAG_LEN + H2)                      # x in + out
        + FLAG_LEN * H1 + H1 + H1 * H2 + H2                 # params
    )

    out = pl.pallas_call(
        mlp_kernel,
        out_shape=jax.ShapeDtypeStruct((padded_batch, H2), jnp.float32),
        grid=(num_tiles,),
        in_specs=[
            pl.BlockSpec((tb, FLAG_LEN), lambda i: (i, 0)),   # x  tile (streams)
            pl.BlockSpec((FLAG_LEN, H1), lambda i: (0, 0)),   # w1 resident
            pl.BlockSpec((1, H1), lambda i: (0, 0)),          # b1 resident
            pl.BlockSpec((H1, H2), lambda i: (0, 0)),         # w2 resident
            pl.BlockSpec((1, H2), lambda i: (0, 0)),          # b2 resident
        ],
        out_specs=pl.BlockSpec((tb, H2), lambda i: (i, 0)),
        compiler_params=pltpu.CompilerParams(
            dimension_semantics=("parallel",),       # shard batch across TCs (v7x)
            vmem_limit_bytes=32 * 1024 * 1024,       # headroom on v7x's 64 MiB VMEM
        ),
        cost_estimate=pl.CostEstimate(
            flops=int(flops), transcendentals=0, bytes_accessed=int(bytes_accessed)
        ),
    )(x, w1, b1, w2, b2)

    if padded_batch != batch:
        out = out[:batch]
    return out


def init_params(key):
    # Deterministic PyTorch-Linear-style init: U(-1/sqrt(fan_in), 1/sqrt(fan_in))
    k1, k2, k3, k4 = jax.random.split(key, 4)
    bound1 = 1.0 / jnp.sqrt(jnp.float32(FLAG_LEN))
    bound2 = 1.0 / jnp.sqrt(jnp.float32(H1))
    w1 = jax.random.uniform(k1, (FLAG_LEN, H1), jnp.float32, -bound1, bound1)
    b1 = jax.random.uniform(k2, (1, H1), jnp.float32, -bound1, bound1)
    w2 = jax.random.uniform(k3, (H1, H2), jnp.float32, -bound2, bound2)
    b2 = jax.random.uniform(k4, (1, H2), jnp.float32, -bound2, bound2)
    return w1, b1, w2, b2


def _reference(x, w1, b1, w2, b2):
    return jnp.maximum(x @ w1 + b1, 0.0) @ w2 + b2


if __name__ == "__main__":
    key = jax.random.PRNGKey(0)
    kx, kx2, kp = jax.random.split(key, 3)

    w1, b1, w2, b2 = init_params(kp)

    # Primary small-shape check (batch=2).
    batch = 2
    x = jax.random.normal(kx, (batch, FLAG_LEN), jnp.float32)
    out = mlp_forward(x, w1, b1, w2, b2)
    jax.block_until_ready(out)
    ref = _reference(x, w1, b1, w2, b2)
    assert out.shape == (batch, H2)
    assert jnp.allclose(out, ref, atol=1e-5, rtol=1e-5)

    # Secondary check exercising the batch-padding path (batch not a multiple of 8).
    batch2 = 333
    x2 = jax.random.normal(kx2, (batch2, FLAG_LEN), jnp.float32)
    out2 = mlp_forward(x2, w1, b1, w2, b2)
    jax.block_until_ready(out2)
    ref2 = _reference(x2, w1, b1, w2, b2)
    assert out2.shape == (batch2, H2)
    assert jnp.allclose(out2, ref2, atol=1e-5, rtol=1e-5)

    print("KERNEL_OK")
</pallas_src>

<mosaic_0001>
module attributes {stable_mosaic.version = 11 : i64} {
  func.func @mlp_kernel(%arg0: i32, %arg1: memref<8x26xf32, #tpu.memory_space<vmem>>, %arg2: memref<26x22xf32, #tpu.memory_space<vmem>>, %arg3: memref<1x22xf32, #tpu.memory_space<vmem>>, %arg4: memref<22x18xf32, #tpu.memory_space<vmem>>, %arg5: memref<1x18xf32, #tpu.memory_space<vmem>>, %arg6: memref<8x18xf32, #tpu.memory_space<vmem>>) attributes {dimension_semantics = [#tpu.dimension_semantics<parallel>], iteration_bounds = array<i64: 1>, scalar_prefetch = 0 : i64, scratch_operands = 0 : i64, tpu.core_type = #tpu.core_type<tc>, window_params = [{transform_indices = @transform_0, window_bounds = array<i64: 8, 26>}, {pipeline_mode = #tpu.pipeline_mode<synchronous>, transform_indices = @transform_1, window_bounds = array<i64: 26, 22>}, {pipeline_mode = #tpu.pipeline_mode<synchronous>, transform_indices = @transform_2, window_bounds = array<i64: 1, 22>}, {pipeline_mode = #tpu.pipeline_mode<synchronous>, transform_indices = @transform_3, window_bounds = array<i64: 22, 18>}, {pipeline_mode = #tpu.pipeline_mode<synchronous>, transform_indices = @transform_4, window_bounds = array<i64: 1, 18>}, {transform_indices = @transform_5, window_bounds = array<i64: 8, 18>}]} {
    %c0 = arith.constant 0 : index
    %c0_0 = arith.constant 0 : index
    %0 = vector.load %arg1[%c0, %c0_0] : memref<8x26xf32, #tpu.memory_space<vmem>>, vector<8x26xf32>
    %c0_1 = arith.constant 0 : index
    %c0_2 = arith.constant 0 : index
    %1 = vector.load %arg2[%c0_1, %c0_2] : memref<26x22xf32, #tpu.memory_space<vmem>>, vector<26x22xf32>
    %cst = arith.constant dense<0.000000e+00> : vector<8x22xf32>
    %2 = tpu.matmul %0, %1, %cst {dimension_numbers = #tpu.dot_dimension_numbers<[1], [0], [0], [1], [0, 0, 1, 1], [], []>} : vector<8x26xf32>, vector<26x22xf32>, vector<8x22xf32> -> vector<8x22xf32>
    %c0_3 = arith.constant 0 : index
    %c0_4 = arith.constant 0 : index
    %3 = vector.load %arg3[%c0_3, %c0_4] : memref<1x22xf32, #tpu.memory_space<vmem>>, vector<1x22xf32>
    %4 = vector.broadcast %3 : vector<1x22xf32> to vector<8x22xf32>
    %5 = arith.addf %2, %4 : vector<8x22xf32>
    %cst_5 = arith.constant 0.000000e+00 : f32
    %6 = vector.broadcast %cst_5 : f32 to vector<8x22xf32>
    %7 = arith.maximumf %5, %6 : vector<8x22xf32>
    %c0_6 = arith.constant 0 : index
    %c0_7 = arith.constant 0 : index
    %8 = vector.load %arg4[%c0_6, %c0_7] : memref<22x18xf32, #tpu.memory_space<vmem>>, vector<22x18xf32>
    %cst_8 = arith.constant dense<0.000000e+00> : vector<8x18xf32>
    %9 = tpu.matmul %7, %8, %cst_8 {dimension_numbers = #tpu.dot_dimension_numbers<[1], [0], [0], [1], [0, 0, 1, 1], [], []>} : vector<8x22xf32>, vector<22x18xf32>, vector<8x18xf32> -> vector<8x18xf32>
    %c0_9 = arith.constant 0 : index
    %c0_10 = arith.constant 0 : index
    %10 = vector.load %arg5[%c0_9, %c0_10] : memref<1x18xf32, #tpu.memory_space<vmem>>, vector<1x18xf32>
    %11 = vector.broadcast %10 : vector<1x18xf32> to vector<8x18xf32>
    %12 = arith.addf %9, %11 : vector<8x18xf32>
    %c0_11 = arith.constant 0 : index
    %c0_12 = arith.constant 0 : index
    %13 = vector.load %arg6[%c0_11, %c0_12] : memref<8x18xf32, #tpu.memory_space<vmem>>, vector<8x18xf32>
    tpu.vector_store %arg6[%c0_11, %c0_12], %12 {strides = array<i32>} : memref<8x18xf32, #tpu.memory_space<vmem>>, vector<8x18xf32>,
    return
  }
  func.func @transform_0(%arg0: i32) -> (i32, i32) {
    %c0_i32 = arith.constant 0 : i32
    %c0_i32_0 = arith.constant 0 : i32
    return %arg0, %c0_i32 : i32, i32
  }
  func.func @transform_1(%arg0: i32) -> (i32, i32) {
    %c0_i32 = arith.constant 0 : i32
    %c0_i32_0 = arith.constant 0 : i32
    %c0_i32_1 = arith.constant 0 : i32
    return %c0_i32, %c0_i32_0 : i32, i32
  }
  func.func @transform_2(%arg0: i32) -> (i32, i32) {
    %c0_i32 = arith.constant 0 : i32
    %c0_i32_0 = arith.constant 0 : i32
    %c0_i32_1 = arith.constant 0 : i32
    return %c0_i32, %c0_i32_0 : i32, i32
  }
  func.func @transform_3(%arg0: i32) -> (i32, i32) {
    %c0_i32 = arith.constant 0 : i32
    %c0_i32_0 = arith.constant 0 : i32
    %c0_i32_1 = arith.constant 0 : i32
    return %c0_i32, %c0_i32_0 : i32, i32
  }
  func.func @transform_4(%arg0: i32) -> (i32, i32) {
    %c0_i32 = arith.constant 0 : i32
    %c0_i32_0 = arith.constant 0 : i32
    %c0_i32_1 = arith.constant 0 : i32
    return %c0_i32, %c0_i32_0 : i32, i32
  }
  func.func @transform_5(%arg0: i32) -> (i32, i32) {
    %c0_i32 = arith.constant 0 : i32
    %c0_i32_0 = arith.constant 0 : i32
    return %arg0, %c0_i32 : i32, i32
  }
}

</mosaic_0001>

<llo_original>
// kernel: mlp_forward.1
$region0: #{mlp_forward.1}
  #allocation0 [shape = 'u32[]', space=smem, size = 0x4, offset = 0x4, fixed_abs, tag = 'smem constant byte address 0x4 - core index']
  #allocation1 [shape = 'u32[72,128]{1,0:T(1,128)}', space=vmem, size = 0x9000, scoped, tag = 'internal scratch']
  %s0 = inlined_call_operand.vmem [shape: f32[8,26], index: 0, kind: input, shape index: {}]
  %s1 = inlined_call_operand.vmem [shape: f32[26,22], index: 1, kind: input, shape index: {}]
  %s2 = inlined_call_operand.vmem [shape: f32[1,22], index: 2, kind: input, shape index: {}]
  %s3 = inlined_call_operand.vmem [shape: f32[22,18], index: 3, kind: input, shape index: {}]
  %s4 = inlined_call_operand.vmem [shape: f32[1,18], index: 4, kind: input, shape index: {}]
  %s5 = inlined_call_operand.vmem [shape: f32[8,18], index: 5, kind: output, shape index: {}]
  %s6 = sld [smem:[#allocation0]]
  $region30: #{mlp_forward.1} parent=0
    _
  %s8 = ssub.s32 1, %s6
  %s9 = scalar_select 0, %s8, %s6
  // Predicated region
  $region2: #{mlp_forward.1} parent=0 // pred_check
    _
  $region3: #{mlp_forward.1} parent=0 // pred_check_branch
    %11 = sbr.rel (0) target = $region5
  $region4: #{mlp_forward.1} parent=0 // pred_region
    _
  $region5: #{mlp_forward.1} parent=0 // pred_fallthru
    _
  // Predicated region
  $region6: #{mlp_forward.1} parent=0 // pred_check
    _
  $region7: #{mlp_forward.1} parent=0 // pred_check_branch
    %13 = sbr.rel (0) target = $region9
  $region8: #{mlp_forward.1} parent=0 // pred_region
    _
  $region9: #{mlp_forward.1} parent=0 // pred_fallthru
    _
  // Predicated region
  $region10: #{mlp_forward.1} parent=0 // pred_check
    _
  $region11: #{mlp_forward.1} parent=0 // pred_check_branch
    %15 = sbr.rel (0) target = $region13
  $region12: #{mlp_forward.1} parent=0 // pred_region
    _
  $region13: #{mlp_forward.1} parent=0 // pred_fallthru
    _
  // Predicated region
  $region14: #{mlp_forward.1} parent=0 // pred_check
    _
  $region15: #{mlp_forward.1} parent=0 // pred_check_branch
    %17 = sbr.rel (0) target = $region17
  $region16: #{mlp_forward.1} parent=0 // pred_region
    _
  $region17: #{mlp_forward.1} parent=0 // pred_fallthru
    _
  // Predicated region
  $region18: #{mlp_forward.1} parent=0 // pred_check
    _
  $region19: #{mlp_forward.1} parent=0 // pred_check_branch
    %19 = sbr.rel (0) target = $region21
  $region20: #{mlp_forward.1} parent=0 // pred_region
    _
  $region21: #{mlp_forward.1} parent=0 // pred_fallthru
    _
  %v20 = vld [vmem:[%s0] sm:$0xff]
  %v21 = vld [vmem:[%s1] sm:$0xff]
  %v22 = vld [vmem:[%s1 + $0x8] sm:$0xff]
  %v23 = vld [vmem:[%s1 + $0x10] sm:$0xff]
  %v24 = vld [vmem:[%s1 + $0x18] sm:$0x3]
  %v25 = vld [vmem:[%s2] sm:$0x1]
  %v27 = vperm.slane %v25, 0
  %vm29 = vcmask 211968
  %v31 = vsel %vm29, %v20, 0
  %vm33 = vcmask 1041408
  %v35 = vsel %vm33, %v24, 0
  %37 = vmatpush.msra.mxu0 0.0
  %38 = vmatpush.msra.mxu0 0.0
  %39 = vmatpush.msra.mxu0 0.0
  %40 = vmatpush.msra.mxu0 0.0
  %41 = vmatpush.msra.mxu0 0.0
  %42 = vmatpush.msra.mxu0 0.0
  %43 = vmatpush.msra.mxu0 0.0
  %44 = vmatpush.msra.mxu0 0.0
  %45 = vmatpush.msra.mxu0 0.0
  %46 = vmatpush.msra.mxu0 0.0
  %47 = vmatpush.msra.mxu0 0.0
  %48 = vmatpush.msra.mxu0 0.0
  %49 = vmatpush.msra.mxu0 %v35
  %50 = vmatpush.msra.mxu0 %v23
  %51 = vmatpush.msra.mxu0 %v22
  %52 = vmatpush.msra.mxu0 %v21
  %53 = vmatmul.f32.gmra.mxu0 %v31
  %v54 = vpop.f32.mrf.mxu0
  %v55 = vadd.f32 %v27, %v54
  %56 = vdwg.mxu0
  %v57 = vmax.f32 %v55, 0.0
  %v58 = vld [vmem:[%s3] sm:$0xff]
  %v59 = vld [vmem:[%s3 + $0x8] sm:$0xff]
  %v60 = vld [vmem:[%s3 + $0x10] sm:$0x3f]
  %v61 = vld [vmem:[%s4] sm:$0x1]
  %v63 = vperm.slane %v61, 0
  %vm65 = vcmask 179200
  %v67 = vsel %vm65, %v57, 0
  %vm69 = vcmask 1045504
  %v71 = vsel %vm69, %v60, 0
  %73 = vmatpush.msra.mxu0 0.0
  %74 = vmatpush.msra.mxu0 0.0
  %75 = vmatpush.msra.mxu0 0.0
  %76 = vmatpush.msra.mxu0 0.0
  %77 = vmatpush.msra.mxu0 0.0
  %78 = vmatpush.msra.mxu0 0.0
  %79 = vmatpush.msra.mxu0 0.0
  %80 = vmatpush.msra.mxu0 0.0
  %81 = vmatpush.msra.mxu0 0.0
  %82 = vmatpush.msra.mxu0 0.0
  %83 = vmatpush.msra.mxu0 0.0
  %84 = vmatpush.msra.mxu0 0.0
  %85 = vmatpush.msra.mxu0 0.0
  %86 = vmatpush.msra.mxu0 %v71
  %87 = vmatpush.msra.mxu0 %v59
  %88 = vmatpush.msra.mxu0 %v58
  %89 = vmatmul.f32.gmra.mxu0 %v67
  %v90 = vpop.f32.mrf.mxu0
  %v91 = vadd.f32 %v63, %v90
  %92 = vdwg.mxu0
  %vm93 = vcmask 146432
  %94 = vst.msk [vmem:[%s5] sm:$0xff] %vm93, %v91
  // Predicated region
  $region22: #{mlp_forward.1} parent=0 // pred_check
    _
  $region23: #{mlp_forward.1} parent=0 // pred_check_branch
    %96 = sbr.rel (0) target = $region25
  $region24: #{mlp_forward.1} parent=0 // pred_region
    _
  $region25: #{mlp_forward.1} parent=0 // pred_fallthru
    _
  // Predicated region
  $region26: #{mlp_forward.1} parent=0 // pred_check
    _
  $region27: #{mlp_forward.1} parent=0 // pred_check_branch
    %98 = sbr.rel (0) target = $region29
  $region28: #{mlp_forward.1} parent=0 // pred_region
    _
  $region29: #{mlp_forward.1} parent=0 // pred_fallthru
    _

</llo_original>
